<compile_context>
chip_gen: v5e
topology: v5e:2x2
jax: 0.10.0
libtpu: 0.0.40
codegen_flags: <defaults>
</compile_context>

<pallas_src>
import functools

import jax
import jax.numpy as jnp
from jax.experimental import pallas as pl
from jax.experimental.pallas import tpu as pltpu


def _round_up(a, b):
    return (a + b - 1) // b * b


def _choose_tiles(n):
    """(n_pad, tq, tk) honoring (8,128) blocks, the VMEM budget, and an even dst-tile count."""
    if n <= 128:                                # whole graph in one block
        n_pad = _round_up(n, 8)
        return n_pad, n_pad, n_pad
    if n >= 4096:
        tq, tk = 512, 2048                      # ~4 MiB double-buffered adj tiles; amortizes per-step overhead
    elif n >= 2048:
        tq, tk = 512, 1024
    elif n >= 1024:
        tq, tk = 256, 512
    else:
        tq, tk = 128, 128
    # Pad so the dst ("parallel") axis always has an EVEN tile count -> splits across v7x's 2 TCs.
    n_pad = _round_up(n, max(tk, 2 * tq))
    return n_pad, tq, tk


def _score_dtype():
    """bf16 score pipeline on chips with bf16 VPU/EUP (v6e/v7x); f32 on v5e and older."""
    try:
        kind = jax.devices()[0].device_kind.lower()
    except Exception:
        return jnp.float32
    if any(t in kind for t in ("v2", "v3", "v4", "v5")):
        return jnp.float32
    return jnp.bfloat16


# ---------------------------------------------------------------------------
# Kernel 1: fused projection  [x | 1] @ [W_heads(+ones col) | W a_src | W a_dst]
# ---------------------------------------------------------------------------
def proj_kernel(x_ref, wcat_ref, h_ref, asrc_ref, adst_ref, *, hfa, heads):
    z = jnp.dot(x_ref[...], wcat_ref[...], preferred_element_type=jnp.float32)
    h_ref[...] = z[:, :hfa].astype(jnp.bfloat16)           # per-head features + ones column
    asrc_ref[...] = z[:, hfa:hfa + heads]                   # [tile, H]
    adst_ref[...] = z[:, hfa + heads:hfa + 2 * heads]       # [tile, H]


def gat_project(x_aug, w_cat, *, heads, hfa, tile):
    n_pad, fin_aug = x_aug.shape
    wcols = w_cat.shape[1]
    kernel = functools.partial(proj_kernel, hfa=hfa, heads=heads)
    cost = pl.CostEstimate(
        flops=int(2 * n_pad * fin_aug * wcols),
        transcendentals=0,
        bytes_accessed=int(n_pad * fin_aug * 4 + fin_aug * wcols * 4
                           + n_pad * hfa * 2 + n_pad * 2 * heads * 4))
    return pl.pallas_call(
        kernel,
        out_shape=(
            jax.ShapeDtypeStruct((n_pad, hfa), jnp.bfloat16),
            jax.ShapeDtypeStruct((n_pad, heads), jnp.float32),
            jax.ShapeDtypeStruct((n_pad, heads), jnp.float32),
        ),
        grid_spec=pltpu.PrefetchScalarGridSpec(
            num_scalar_prefetch=0,
            grid=(n_pad // tile,),
            in_specs=[
                pl.BlockSpec((tile, fin_aug), lambda i: (i, 0)),
                pl.BlockSpec((fin_aug, wcols), lambda i: (0, 0)),
            ],
            out_specs=(
                pl.BlockSpec((tile, hfa), lambda i: (i, 0)),
                pl.BlockSpec((tile, heads), lambda i: (i, 0)),
                pl.BlockSpec((tile, heads), lambda i: (i, 0)),
            ),
        ),
        compiler_params=pltpu.CompilerParams(dimension_semantics=("parallel",)),
        cost_estimate=cost,
    )(x_aug, w_cat)


# ---------------------------------------------------------------------------
# Kernel 2: tiled attention with online (flash-style) softmax + tile skipping
# ---------------------------------------------------------------------------
def attn_kernel(occ_ref, adj_ref, h_ref, asrc_t_ref, adst_ref, bias_ref, out_ref,
                m_ref, acc_ref,
                *, heads, out_dim_pad, score_dtype, negative_slope,
                apply_elu, apply_sigmoid):
    fp = out_dim_pad + 1                       # per-head width: features + l ("ones") column
    i = pl.program_id(0)
    k = pl.program_id(1)

    @pl.when(k == 0)
    def _init():
        m_ref[...] = jnp.full_like(m_ref, -jnp.inf)
        acc_ref[...] = jnp.zeros_like(acc_ref)

    @pl.when(occ_ref[i, k] > 0)                # skip adjacency tiles with no edges
    def _compute():
        adj_b = adj_ref[...].astype(score_dtype)      # [tq, tk] additive mask (0 / -1e30)
        a_dst = adst_ref[...].astype(score_dtype)     # [tq, H]
        a_src = asrc_t_ref[...].astype(score_dtype)   # [H, tk] (pre-transposed, row layout)
        m_prev = m_ref[...]                           # [tq, H] f32

        pd_parts, corr_parts, m_cols = [], [], []
        for hh in range(heads):                       # heads are few and static -> unrolled
            e = a_dst[:, hh:hh + 1] + a_src[hh:hh + 1, :] + adj_b        # [tq, tk]
            e = jnp.maximum(e, negative_slope * e)                        # LeakyReLU(0.2)
            m_prev_h = m_prev[:, hh:hh + 1]
            m_new = jnp.maximum(
                m_prev_h, jnp.max(e, axis=1, keepdims=True).astype(jnp.float32))
            corr = jnp.exp(m_prev_h - m_new)                              # [tq, 1] f32
            # Masked scores sit at ~-2e29 and underflow to 0 after the running-max shift;
            # any transient all-masked-row garbage is erased later by corr (self-loops
            # guarantee a finite score for every row, including padded rows).
            p = jnp.exp(e - m_new.astype(score_dtype)).astype(jnp.bfloat16)
            # MXU produces the weighted feature sum AND sum(p): last RHS column is ones.
            pd = jnp.dot(p, h_ref[:, hh * fp:(hh + 1) * fp],
                         preferred_element_type=jnp.float32)              # [tq, fp]
            pd_parts.append(pd)
            corr_parts.append(jnp.broadcast_to(corr, (corr.shape[0], fp)))
            m_cols.append(m_new)

        pd_full = pd_parts[0] if heads == 1 else jnp.concatenate(pd_parts, axis=1)
        corr_full = corr_parts[0] if heads == 1 else jnp.concatenate(corr_parts, axis=1)
        m_full = m_cols[0] if heads == 1 else jnp.concatenate(m_cols, axis=1)
        # Single full-width scratch updates per k step (no narrow masked vld/vst).
        acc_ref[...] = corr_full * acc_ref[...] + pd_full
        m_ref[...] = m_full

    @pl.when(k == pl.num_programs(1) - 1)
    def _finalize():
        acc = acc_ref[...]
        bias = bias_ref[...]                                  # [1, H*out_dim_pad]
        outs = []
        for hh in range(heads):
            blk = acc[:, hh * fp:(hh + 1) * fp]
            l = jnp.maximum(blk[:, out_dim_pad:out_dim_pad + 1], jnp.float32(1e-30))
            outs.append(blk[:, :out_dim_pad] * pl.reciprocal(l, approx=True))
        o = (outs[0] if heads == 1 else jnp.concatenate(outs, axis=1)) + bias
        if apply_elu:
            # ELU(alpha=1); clamp the exp argument so the unused branch never overflows.
            o = jnp.where(o > 0, o, jnp.exp(jnp.minimum(o, 0.0)) - 1.0)
        if apply_sigmoid:
            o = jax.nn.sigmoid(o)
        out_ref[...] = o                                      # single lane-dense store


def gat_attention(occ, adj_bias, h_aug, asrc_t, adst, bias_pad, *, heads, out_dim_pad,
                  tq, tk, score_dtype, apply_elu, apply_sigmoid):
    n_pad = adj_bias.shape[0]
    fp = out_dim_pad + 1
    hfa = heads * fp
    hf_pad = heads * out_dim_pad
    kernel = functools.partial(
        attn_kernel, heads=heads, out_dim_pad=out_dim_pad, score_dtype=score_dtype,
        negative_slope=0.2, apply_elu=apply_elu, apply_sigmoid=apply_sigmoid)

    # Deliberate VMEM budget (double-buffered inputs/outputs + scratch + e/p transients),
    # capped under v7x's 64 MiB physical VMEM.
    score_bytes = 2 if score_dtype == jnp.bfloat16 else 4
    est = (2 * tq * tk * 2 + 2 * tk * hfa * 2
           + 2 * heads * tk * 4 + 2 * tq * heads * 4 + 2 * hf_pad * 4
           + 2 * tq * hf_pad * 4 + tq * heads * 4 + tq * hfa * 4
           + 6 * tq * tk * score_bytes)
    vmem_limit = int(max(32 << 20, min(est + (8 << 20), 56 << 20)))

    cost = pl.CostEstimate(
        flops=int(n_pad) * int(n_pad) * heads * (2 * fp + 10),
        transcendentals=int(n_pad) * int(n_pad) * heads,
        bytes_accessed=int(n_pad * n_pad * 2 + (n_pad // tq) * n_pad * hfa * 2
                           + n_pad * hf_pad * 4 + n_pad * heads * 8))

    return pl.pallas_call(
        kernel,
        out_shape=jax.ShapeDtypeStruct((n_pad, hf_pad), jnp.float32),
        grid_spec=pltpu.PrefetchScalarGridSpec(
            num_scalar_prefetch=1,                              # occ -> SMEM
            grid=(n_pad // tq, n_pad // tk),
            in_specs=[
                pl.BlockSpec((tq, tk), lambda i, k, occ_r: (i, k)),     # additive mask tile (bf16)
                pl.BlockSpec((tk, hfa), lambda i, k, occ_r: (k, 0)),    # augmented src features
                pl.BlockSpec((heads, tk), lambda i, k, occ_r: (0, k)),  # alpha_src (row layout)
                pl.BlockSpec((tq, heads), lambda i, k, occ_r: (i, 0)),  # alpha_dst
                pl.BlockSpec((1, hf_pad), lambda i, k, occ_r: (0, 0)),  # bias
            ],
            out_specs=pl.BlockSpec((tq, hf_pad), lambda i, k, occ_r: (i, 0)),
            scratch_shapes=[
                pltpu.VMEM((tq, heads), jnp.float32),                   # running max  m
                pltpu.VMEM((tq, hfa), jnp.float32),                     # accumulator (incl. l cols)
            ],
        ),
        compiler_params=pltpu.CompilerParams(
            dimension_semantics=("parallel", "arbitrary"),
            vmem_limit_bytes=vmem_limit),
        cost_estimate=cost,
    )(occ, adj_bias, h_aug, asrc_t, adst, bias_pad)


# ---------------------------------------------------------------------------
# Layer / model glue
# ---------------------------------------------------------------------------
def init_gat_layer_params(key, in_dim, out_dim, heads):
    k1, k2, k3, k4 = jax.random.split(key, 4)
    scale = 1.0 / jnp.sqrt(jnp.float32(in_dim))
    return dict(
        w=jax.random.normal(k1, (heads, in_dim, out_dim), jnp.float32) * scale,
        a_src=jax.random.normal(k2, (heads, 1, out_dim), jnp.float32) * 0.1,
        a_dst=jax.random.normal(k3, (heads, 1, out_dim), jnp.float32) * 0.1,
        bias=jax.random.normal(k4, (1, heads * out_dim), jnp.float32) * 0.01,
    )


def gat_layer_apply(h, adj_bias, occ, params, *, heads, out_dim, tq, tk,
                    apply_elu, apply_sigmoid, score_dtype):
    W, a_src, a_dst, bias = params["w"], params["a_src"], params["a_dst"], params["bias"]
    H, fin, fout = W.shape
    n_pad = h.shape[0]

    # Lane-dense output padding (implements the last-layer TODO): pad the per-head width so
    # the concatenated output is >= one vreg row whenever it would otherwise be narrower.
    fout_pad = (-(-128 // H)) if H * fout < 128 else fout
    hf_pad = H * fout_pad
    fp = fout_pad + 1                 # +1 "ones" column -> MXU also yields sum(p) (the l column)
    hfa = H * fp

    # Fused projection weights over the augmented input [x | 1]:
    #   x_aug @ w_cat = [h_0 | 1 | h_1 | 1 | ... | W a_src | W a_dst]   (head-major columns)
    Wp = jnp.zeros((H, fin + 1, fp), jnp.float32)
    Wp = Wp.at[:, :fin, :fout].set(W)
    Wp = Wp.at[:, fin, fout_pad].set(1.0)               # ones column from the constant-1 feature
    w_heads = jnp.transpose(Wp, (1, 0, 2)).reshape(fin + 1, hfa)
    wa_src = jnp.concatenate([jnp.einsum("hfo,ho->fh", W, a_src[:, 0, :]),
                              jnp.zeros((1, H), jnp.float32)], axis=0)
    wa_dst = jnp.concatenate([jnp.einsum("hfo,ho->fh", W, a_dst[:, 0, :]),
                              jnp.zeros((1, H), jnp.float32)], axis=0)
    w_cat = jnp.concatenate([w_heads, wa_src, wa_dst], axis=1)

    bias_pad = jnp.zeros((1, H, fout_pad), jnp.float32)
    bias_pad = bias_pad.at[:, :, :fout].set(bias.reshape(1, H, fout)).reshape(1, hf_pad)

    x_aug = jnp.concatenate([h, jnp.ones((n_pad, 1), h.dtype)], axis=1)
    hp, asrc, adst = gat_project(x_aug, w_cat, heads=H, hfa=hfa, tile=tq)
    asrc_t = asrc.T                                     # [H, N] row layout (cheap XLA transpose)

    out_pad = gat_attention(occ, adj_bias, hp, asrc_t, adst, bias_pad, heads=H,
                            out_dim_pad=fout_pad, tq=tq, tk=tk, score_dtype=score_dtype,
                            apply_elu=apply_elu, apply_sigmoid=apply_sigmoid)
    if fout_pad != fout:
        out_pad = out_pad.reshape(n_pad, H, fout_pad)[:, :, :fout].reshape(n_pad, H * fout)
    return out_pad


def gat_model_forward(x, edge_index, params_list, heads_list, out_dims):
    n = x.shape[0]
    n_pad, tq, tk = _choose_tiles(n)
    score_dtype = _score_dtype()

    src, dst = edge_index[0], edge_index[1]
    ar = jnp.arange(n_pad)

    # Additive attention mask (PyG source_to_target flow + self loops, also on padded rows):
    # 0.0 where edge j->i (or self loop) exists, -1e30 elsewhere.  Built directly in bf16 —
    # no jnp.eye, no extra max/cast passes over the N^2 array.
    adj_bias = jnp.full((n_pad, n_pad), -1e30, jnp.bfloat16)
    adj_bias = adj_bias.at[dst, src].set(0.0)
    adj_bias = adj_bias.at[ar, ar].set(0.0)

    # Block-sparse tile occupancy: (dst_tile, src_tile) pairs containing at least one edge.
    # TODO(synk): drive the src axis with a data-dependent index_map over only nonempty tiles
    # (scalar-prefetched per-row tile lists) instead of pl.when-skipping inside the dense grid.
    occ = jnp.zeros((n_pad // tq, n_pad // tk), jnp.int32)
    occ = occ.at[dst // tq, src // tk].set(1)
    occ = occ.at[ar // tq, ar // tk].set(1)

    h = jnp.zeros((n_pad, x.shape[1]), x.dtype).at[:n].set(x)
    n_layers = len(params_list)
    for li, p in enumerate(params_list):
        last = li == n_layers - 1
        h = gat_layer_apply(h, adj_bias, occ, p, heads=heads_list[li], out_dim=out_dims[li],
                            tq=tq, tk=tk, apply_elu=not last, apply_sigmoid=last,
                            score_dtype=score_dtype)
    return h[:n].reshape(-1)   # torch.sigmoid(x).view(-1)


def gat_model_reference(x, edge_index, params_list, heads_list, out_dims):
    """Pure-JAX reference (f32, dense softmax) for validation."""
    n = x.shape[0]
    src, dst = edge_index[0], edge_index[1]
    adj = jnp.zeros((n, n), jnp.float32).at[dst, src].set(1.0)
    adj = jnp.maximum(adj, jnp.eye(n, dtype=jnp.float32))
    mask = adj > 0
    h = x
    n_layers = len(params_list)
    for li, p in enumerate(params_list):
        last = li == n_layers - 1
        H = p["w"].shape[0]
        cols = []
        for hh in range(H):
            hp = h @ p["w"][hh]
            asrc = hp @ p["a_src"][hh, 0]
            adst = hp @ p["a_dst"][hh, 0]
            e = adst[:, None] + asrc[None, :]
            e = jnp.where(e > 0, e, 0.2 * e)
            e = jnp.where(mask, e, -jnp.inf)
            attn = jax.nn.softmax(e, axis=1)
            cols.append(attn @ hp)
        out = jnp.concatenate(cols, axis=-1) + p["bias"]
        h = jax.nn.sigmoid(out) if last else jax.nn.elu(out)
    return h.reshape(-1)


if __name__ == "__main__":
    key = jax.random.PRNGKey(0)
    N = 200            # nodes (padded to 256 -> 2x2 tile grid, exercises online softmax + skipping)
    input_dim = 4
    hidden_dim = 8
    heads = 4
    num_layers = 3

    k_x, k_e, k_p = jax.random.split(key, 3)

    # Node features (data.x) : [N, input_dim]
    x = jax.random.normal(k_x, (N, input_dim), jnp.float32)

    # edge_index : [2, E]  = ring graph + random edges (deterministic)
    ring = jnp.stack([jnp.arange(N), (jnp.arange(N) + 1) % N])
    rnd = jax.random.randint(k_e, (2, 400), 0, N)
    edge_index = jnp.concatenate([ring, rnd], axis=1)

    # Layer configuration mirrors GATLayer.__init__
    dims = [(input_dim, hidden_dim, heads)]
    for _ in range(num_layers - 2):
        dims.append((hidden_dim * heads, hidden_dim, heads))
    dims.append((hidden_dim * heads, 1, 1))

    keys = jax.random.split(k_p, len(dims))
    params_list = [init_gat_layer_params(k, i, o, h) for k, (i, o, h) in zip(keys, dims)]
    heads_list = [h for (_, _, h) in dims]
    out_dims = [o for (_, o, _) in dims]

    out = gat_model_forward(x, edge_index, params_list, heads_list, out_dims)
    out = jax.block_until_ready(out)
    ref = gat_model_reference(x, edge_index, params_list, heads_list, out_dims)

    assert out.shape == (N,)
    assert bool(jnp.all(jnp.isfinite(out)))
    assert bool(jnp.all((out >= 0.0) & (out <= 1.0)))
    max_err = float(jnp.max(jnp.abs(out - ref)))
    assert max_err < 5e-2, f"max abs err vs reference: {max_err}"
    print("KERNEL_OK")
</pallas_src>

<mosaic_0001>
module attributes {stable_mosaic.version = 11 : i64} {
  func.func @proj_kernel(%arg0: i32, %arg1: memref<128x5xf32, #tpu.memory_space<vmem>>, %arg2: memref<5x140xf32, #tpu.memory_space<vmem>>, %arg3: memref<128x132xbf16, #tpu.memory_space<vmem>>, %arg4: memref<128x4xf32, #tpu.memory_space<vmem>>, %arg5: memref<128x4xf32, #tpu.memory_space<vmem>>) attributes {dimension_semantics = [#tpu.dimension_semantics<parallel>], iteration_bounds = array<i64: 2>, scalar_prefetch = 0 : i64, scratch_operands = 0 : i64, tpu.core_type = #tpu.core_type<tc>, window_params = [{transform_indices = @transform_0, window_bounds = array<i64: 128, 5>}, {pipeline_mode = #tpu.pipeline_mode<synchronous>, transform_indices = @transform_1, window_bounds = array<i64: 5, 140>}, {transform_indices = @transform_2, window_bounds = array<i64: 128, 132>}, {transform_indices = @transform_3, window_bounds = array<i64: 128, 4>}, {transform_indices = @transform_4, window_bounds = array<i64: 128, 4>}]} {
    %c0 = arith.constant 0 : index
    %c0_0 = arith.constant 0 : index
    %0 = vector.load %arg1[%c0, %c0_0] : memref<128x5xf32, #tpu.memory_space<vmem>>, vector<128x5xf32>
    %c0_1 = arith.constant 0 : index
    %c0_2 = arith.constant 0 : index
    %1 = vector.load %arg2[%c0_1, %c0_2] : memref<5x140xf32, #tpu.memory_space<vmem>>, vector<5x140xf32>
    %cst = arith.constant dense<0.000000e+00> : vector<128x140xf32>
    %2 = tpu.matmul %0, %1, %cst {dimension_numbers = #tpu.dot_dimension_numbers<[1], [0], [0], [1], [0, 0, 1, 1], [], []>} : vector<128x5xf32>, vector<5x140xf32>, vector<128x140xf32> -> vector<128x140xf32>
    %3 = vector.extract_strided_slice %2 {offsets = [0, 0], sizes = [128, 132], strides = [1, 1]} : vector<128x140xf32> to vector<128x132xf32>
    %4 = arith.truncf %3 : vector<128x132xf32> to vector<128x132xbf16>
    %c0_3 = arith.constant 0 : index
    %c0_4 = arith.constant 0 : index
    %5 = vector.load %arg3[%c0_3, %c0_4] : memref<128x132xbf16, #tpu.memory_space<vmem>>, vector<128x132xbf16>
    tpu.vector_store %arg3[%c0_3, %c0_4], %4 {strides = array<i32>} : memref<128x132xbf16, #tpu.memory_space<vmem>>, vector<128x132xbf16>,
    %6 = vector.extract_strided_slice %2 {offsets = [0, 132], sizes = [128, 4], strides = [1, 1]} : vector<128x140xf32> to vector<128x4xf32>
    %c0_5 = arith.constant 0 : index
    %c0_6 = arith.constant 0 : index
    %7 = vector.load %arg4[%c0_5, %c0_6] : memref<128x4xf32, #tpu.memory_space<vmem>>, vector<128x4xf32>
    tpu.vector_store %arg4[%c0_5, %c0_6], %6 {strides = array<i32>} : memref<128x4xf32, #tpu.memory_space<vmem>>, vector<128x4xf32>,
    %8 = vector.extract_strided_slice %2 {offsets = [0, 136], sizes = [128, 4], strides = [1, 1]} : vector<128x140xf32> to vector<128x4xf32>
    %c0_7 = arith.constant 0 : index
    %c0_8 = arith.constant 0 : index
    %9 = vector.load %arg5[%c0_7, %c0_8] : memref<128x4xf32, #tpu.memory_space<vmem>>, vector<128x4xf32>
    tpu.vector_store %arg5[%c0_7, %c0_8], %8 {strides = array<i32>} : memref<128x4xf32, #tpu.memory_space<vmem>>, vector<128x4xf32>,
    return
  }
  func.func @transform_0(%arg0: i32) -> (i32, i32) {
    %c0_i32 = arith.constant 0 : i32
    %c0_i32_0 = arith.constant 0 : i32
    return %arg0, %c0_i32 : i32, i32
  }
  func.func @transform_1(%arg0: i32) -> (i32, i32) {
    %c0_i32 = arith.constant 0 : i32
    %c0_i32_0 = arith.constant 0 : i32
    %c0_i32_1 = arith.constant 0 : i32
    return %c0_i32, %c0_i32_0 : i32, i32
  }
  func.func @transform_2(%arg0: i32) -> (i32, i32) {
    %c0_i32 = arith.constant 0 : i32
    %c0_i32_0 = arith.constant 0 : i32
    return %arg0, %c0_i32 : i32, i32
  }
  func.func @transform_3(%arg0: i32) -> (i32, i32) {
    %c0_i32 = arith.constant 0 : i32
    %c0_i32_0 = arith.constant 0 : i32
    return %arg0, %c0_i32 : i32, i32
  }
  func.func @transform_4(%arg0: i32) -> (i32, i32) {
    %c0_i32 = arith.constant 0 : i32
    %c0_i32_0 = arith.constant 0 : i32
    return %arg0, %c0_i32 : i32, i32
  }
}

</mosaic_0001>

<llo_original>
// kernel: tpu_custom_call.1
$region0: #{tpu_custom_call.1}
  #allocation0 [shape = 'u32[]', space=smem, size = 0x4, offset = 0x4, fixed_abs, tag = 'smem constant byte address 0x4 - core index']
  #allocation1 [shape = 'u32[72,128]{1,0:T(1,128)}', space=vmem, size = 0x9000, scoped, tag = 'internal scratch']
  %s0 = inlined_call_operand.vmem [shape: f32[256,5], index: 0, kind: input, shape index: {}]
  %s1 = inlined_call_operand.vmem [shape: f32[5,140], index: 1, kind: input, shape index: {}]
  %s2 = inlined_call_operand.vmem [shape: bf16[256,132], index: 2, kind: output, shape index: {0}]
  %s3 = inlined_call_operand.vmem [shape: f32[256,4], index: 3, kind: output, shape index: {1}]
  %s4 = inlined_call_operand.vmem [shape: f32[256,4], index: 4, kind: output, shape index: {2}]
  %5 = xla_tuple %s2, %s3, %s4
  %s6 = sld [smem:[#allocation0]]
  $region57: #{tpu_custom_call.1} parent=0
    _
  %s8 = ssub.s32 1, %s6
  %s9 = scalar_select 0, %s8, %s6
  loop: start=0, step=1, limit=4
  $region2: #{tpu_custom_call.1} parent=0 // loop_pre_header
    _
  $region3: #{tpu_custom_call.1} parent=0 // loop_header
    %s11 = sphi 0, %s15
    %p12 = scmp.ge.s32.totalorder %s11, 4
    %s21 = sphi 0, %s23
    %s24 = sphi 0, %s21
    %s25 = sphi 0, %s24
    %s41 = sphi 0, %s25
    %s45 = sphi 0, %s45
    %s47 = sphi 0, %s45
    %s48 = sphi 0, %s47
    %s62 = sphi 0, %s48
    %s68 = sphi 0, %s70
    %s71 = sphi 0, %s68
    %s72 = sphi 0, %s71
    %s88 = sphi 0, %s72
    %s94 = sphi 0, %s96
    %s97 = sphi 0, %s94
    %s98 = sphi 0, %s97
    %s114 = sphi 0, %s98
    %s120 = sphi 0, %s122
    %s123 = sphi 0, %s120
    %s124 = sphi 0, %s123
    %s140 = sphi 0, %s124
  $region4: #{tpu_custom_call.1} parent=0 // loop_header_branch
    %14 = sbr.rel (%p12) target = $region8
  $region5: #{tpu_custom_call.1} parent=0 // loop_body
    %s16 = ssub.s32 %s11, 1
    %s17 = ssub.s32 %s11, 2
    %s18 = sadd.s32 %s11, 1
    %s19 = ssub.s32 %s11, %s18
    %p20 = scmp.eq.s32.totalorder %s19, 0
    %s22 = sadd.s32 %s21, 1
    %s23 = scalar_select %p20, %s21, %s22
    %p26 = pneg %p20
    %p27 = scmp.eq.s32.totalorder %s11, 1
    %p28 = por %p26, %p27
    %p29 = scmp.ne.s32.totalorder %s21, %s24
    %p30 = scmp.eq.s32.totalorder %s11, 0
    %p31 = por %p29, %p30
    %p32 = scmp.ne.s32.totalorder %s21, %s24
    %p33 = scmp.eq.s32.totalorder %s16, 1
    %p34 = por %p32, %p33
    %p35 = scmp.ne.s32.totalorder %s24, %s25
    %p36 = scmp.eq.s32.totalorder %s16, 0
    %p37 = por %p35, %p36
    %p38 = scmp.ne.s32.totalorder %s24, %s25
    %p39 = scmp.eq.s32.totalorder %s17, 1
    %p40 = por %p38, %p39
    %p42 = scmp.ne.s32.totalorder %s25, %s41
    %p43 = scmp.eq.s32.totalorder %s17, 0
    %p44 = por %p42, %p43
    %s46 = sadd.s32 %s45, 1
    %p49 = scmp.eq.s32.totalorder %s11, 1
    %p50 = scmp.ne.s32.totalorder %s45, %s47
    %p51 = scmp.eq.s32.totalorder %s11, 0
    %p52 = por %p50, %p51
    %p53 = scmp.ne.s32.totalorder %s45, %s47
    %p54 = scmp.eq.s32.totalorder %s16, 1
    %p55 = por %p53, %p54
    %p56 = scmp.ne.s32.totalorder %s47, %s48
    %p57 = scmp.eq.s32.totalorder %s16, 0
    %p58 = por %p56, %p57
    %p59 = scmp.ne.s32.totalorder %s47, %s48
    %p60 = scmp.eq.s32.totalorder %s17, 1
    %p61 = por %p59, %p60
    %p63 = scmp.ne.s32.totalorder %s48, %s62
    %p64 = scmp.eq.s32.totalorder %s17, 0
    %p65 = por %p63, %p64
    %s66 = ssub.s32 %s11, %s18
    %p67 = scmp.eq.s32.totalorder %s66, 0
    %s69 = sadd.s32 %s68, 1
    %s70 = scalar_select %p67, %s68, %s69
    %p73 = pneg %p67
    %p74 = scmp.eq.s32.totalorder %s11, 1
    %p75 = por %p73, %p74
    %p76 = scmp.ne.s32.totalorder %s68, %s71
    %p77 = scmp.eq.s32.totalorder %s11, 0
    %p78 = por %p76, %p77
    %p79 = scmp.ne.s32.totalorder %s68, %s71
    %p80 = scmp.eq.s32.totalorder %s16, 1
    %p81 = por %p79, %p80
    %p82 = scmp.ne.s32.totalorder %s71, %s72
    %p83 = scmp.eq.s32.totalorder %s16, 0
    %p84 = por %p82, %p83
    %p85 = scmp.ne.s32.totalorder %s71, %s72
    %p86 = scmp.eq.s32.totalorder %s17, 1
    %p87 = por %p85, %p86
    %p89 = scmp.ne.s32.totalorder %s72, %s88
    %p90 = scmp.eq.s32.totalorder %s17, 0
    %p91 = por %p89, %p90
    %s92 = ssub.s32 %s11, %s18
    %p93 = scmp.eq.s32.totalorder %s92, 0
    %s95 = sadd.s32 %s94, 1
    %s96 = scalar_select %p93, %s94, %s95
    %p99 = pneg %p93
    %p100 = scmp.eq.s32.totalorder %s11, 1
    %p101 = por %p99, %p100
    %p102 = scmp.ne.s32.totalorder %s94, %s97
    %p103 = scmp.eq.s32.totalorder %s11, 0
    %p104 = por %p102, %p103
    %p105 = scmp.ne.s32.totalorder %s94, %s97
    %p106 = scmp.eq.s32.totalorder %s16, 1
    %p107 = por %p105, %p106
    %p108 = scmp.ne.s32.totalorder %s97, %s98
    %p109 = scmp.eq.s32.totalorder %s16, 0
    %p110 = por %p108, %p109
    %p111 = scmp.ne.s32.totalorder %s97, %s98
    %p112 = scmp.eq.s32.totalorder %s17, 1
    %p113 = por %p111, %p112
    %p115 = scmp.ne.s32.totalorder %s98, %s114
    %p116 = scmp.eq.s32.totalorder %s17, 0
    %p117 = por %p115, %p116
    %s118 = ssub.s32 %s11, %s18
    %p119 = scmp.eq.s32.totalorder %s118, 0
    %s121 = sadd.s32 %s120, 1
    %s122 = scalar_select %p119, %s120, %s121
    %p125 = pneg %p119
    %p126 = scmp.eq.s32.totalorder %s11, 1
    %p127 = por %p125, %p126
    %p128 = scmp.ne.s32.totalorder %s120, %s123
    %p129 = scmp.eq.s32.totalorder %s11, 0
    %p130 = por %p128, %p129
    %p131 = scmp.ne.s32.totalorder %s120, %s123
    %p132 = scmp.eq.s32.totalorder %s16, 1
    %p133 = por %p131, %p132
    %p134 = scmp.ne.s32.totalorder %s123, %s124
    %p135 = scmp.eq.s32.totalorder %s16, 0
    %p136 = por %p134, %p135
    %p137 = scmp.ne.s32.totalorder %s123, %s124
    %p138 = scmp.eq.s32.totalorder %s17, 1
    %p139 = por %p137, %p138
    %p141 = scmp.ne.s32.totalorder %s124, %s140
    %p142 = scmp.eq.s32.totalorder %s17, 0
    %p143 = por %p141, %p142
    %p144 = scmp.le.s32.totalorder 1, %s11
    %p145 = scmp.lt.s32.totalorder %s11, 3
    %p146 = pnand %p144, %p145
    %p147 = pneg %p146
    // Predicated region
    $region9: #{tpu_custom_call.1} parent=5 // pred_check
      _
    $region10: #{tpu_custom_call.1} parent=5 // pred_check_branch
      %149 = sbr.rel (%p146) target = $region12
    $region11: #{tpu_custom_call.1} parent=5 // pred_region
      %s150 = ssub.s32 %s11, 1
      // Predicated region
      $region13: #{tpu_custom_call.1} parent=11 // pred_check
        %p151 = pneg %p58
      $region14: #{tpu_custom_call.1} parent=11 // pred_check_branch
        %153 = sbr.rel (%p151) target = $region16
      $region15: #{tpu_custom_call.1} parent=11 // pred_region
        _
      $region16: #{tpu_custom_call.1} parent=11 // pred_fallthru
        _
    $region12: #{tpu_custom_call.1} parent=5 // pred_fallthru
      _
    %p154 = scmp.lt.s32.totalorder %s11, 2
    // Predicated region
    $region17: #{tpu_custom_call.1} parent=5 // pred_check
      %p155 = pneg %p154
    $region18: #{tpu_custom_call.1} parent=5 // pred_check_branch
      %157 = sbr.rel (%p155) target = $region20
    $region19: #{tpu_custom_call.1} parent=5 // pred_region
      // Predicated region
      $region21: #{tpu_custom_call.1} parent=19 // pred_check
        %p158 = pneg %p31
      $region22: #{tpu_custom_call.1} parent=19 // pred_check_branch
        %160 = sbr.rel (%p158) target = $region24
      $region23: #{tpu_custom_call.1} parent=19 // pred_region
        %s161 = smul.u32 16, %s11
        %p162 = scmp.lt.s32.totalorder %s161, 31
        %s163 = scalar_select %p162, %s161, 31
        %s164 = smul.addr %s163, 8
        %s165 = scalar_lea.vmem %s0, %s164
        %s166 = smul.u32 16, %s11
      $region24: #{tpu_custom_call.1} parent=19 // pred_fallthru
        _
    $region20: #{tpu_custom_call.1} parent=5 // pred_fallthru
      _
    %p167 = scmp.le.s32.totalorder 1, %s11
    %p168 = scmp.lt.s32.totalorder %s11, 3
    %p169 = pnand %p167, %p168
    %p170 = pneg %p169
    // Predicated region
    $region25: #{tpu_custom_call.1} parent=5 // pred_check
      _
    $region26: #{tpu_custom_call.1} parent=5 // pred_check_branch
      %172 = sbr.rel (%p169) target = $region28
    $region27: #{tpu_custom_call.1} parent=5 // pred_region
      %s173 = ssub.s32 %s11, 1
      %s174 = smul.u32 16, %s16
      %p175 = scmp.lt.s32.totalorder %s174, 31
      %s176 = scalar_select %p175, %s174, 31
      %s177 = smul.addr %s176, 8
      %s178 = scalar_lea.vmem %s0, %s177
      %p179 = pneg %p37
      %p180 = pneg %p34
      %p181 = pneg %p58
      %p182 = pneg %p55
      %p183 = pneg %p84
      %p184 = pneg %p81
      %s185 = smul.u32 16, %s16
      %p186 = scmp.lt.s32.totalorder %s185, 31
      %s187 = scalar_select %p186, %s185, 31
      %s188 = smul.addr %s187, 2
      %s189 = smul.addr %s188, 4
      %s190 = scalar_lea.vmem %s2, %s189
      %p191 = pneg %p110
      %p192 = pneg %p107
      %s193 = smul.u32 16, %s16
      %p194 = scmp.lt.s32.totalorder %s193, 31
      %s195 = scalar_select %p194, %s193, 31
      %s196 = smul.addr %s195, 8
      %s197 = scalar_lea.vmem %s3, %s196
      %p198 = pneg %p136
      %p199 = pneg %p133
      %s200 = smul.u32 16, %s16
      %p201 = scmp.lt.s32.totalorder %s200, 31
      %s202 = scalar_select %p201, %s200, 31
      %s203 = smul.addr %s202, 8
      %s204 = scalar_lea.vmem %s4, %s203
      %s205 = smul.u32 16, %s16
      %p206 = scmp.lt.s32.totalorder %s205, 31
      %s207 = scalar_select %p206, %s205, 31
      %s208 = smul.addr %s207, 8
      %s209 = scalar_lea.vmem %s0, %s208
      %s210 = smul.u32 16, %s16
      %s211 = smul.u32 16, %s16
      %p212 = scmp.lt.s32.totalorder %s211, 31
      %s213 = scalar_select %p212, %s211, 31
      %s214 = smul.addr %s213, 2
      %s215 = smul.addr %s214, 4
      %s216 = scalar_lea.vmem %s2, %s215
      %s217 = smul.u32 16, %s16
      %s218 = smul.u32 16, %s16
      %p219 = scmp.lt.s32.totalorder %s218, 31
      %s220 = scalar_select %p219, %s218, 31
      %s221 = smul.addr %s220, 8
      %s222 = scalar_lea.vmem %s3, %s221
      %s223 = smul.u32 16, %s16
      %s224 = smul.u32 16, %s16
      %p225 = scmp.lt.s32.totalorder %s224, 31
      %s226 = scalar_select %p225, %s224, 31
      %s227 = smul.addr %s226, 8
      %s228 = scalar_lea.vmem %s4, %s227
      %s229 = smul.u32 16, %s16
      %v230 = vld [vmem:[%s209] sm:$0xff]
      %v231 = vld [vmem:[%s209 + $0x8] sm:$0xff]
      %v232 = vld [vmem:[%s209 + $0x10] sm:$0xff]
      %v233 = vld [vmem:[%s209 + $0x18] sm:$0xff]
      %v234 = vld [vmem:[%s209 + $0x20] sm:$0xff]
      %v235 = vld [vmem:[%s209 + $0x28] sm:$0xff]
      %v236 = vld [vmem:[%s209 + $0x30] sm:$0xff]
      %v237 = vld [vmem:[%s209 + $0x38] sm:$0xff]
      %v238 = vld [vmem:[%s209 + $0x40] sm:$0xff]
      %v239 = vld [vmem:[%s209 + $0x48] sm:$0xff]
      %v240 = vld [vmem:[%s209 + $0x50] sm:$0xff]
      %v241 = vld [vmem:[%s209 + $0x58] sm:$0xff]
      %v242 = vld [vmem:[%s209 + $0x60] sm:$0xff]
      %v243 = vld [vmem:[%s209 + $0x68] sm:$0xff]
      %v244 = vld [vmem:[%s209 + $0x70] sm:$0xff]
      %v245 = vld [vmem:[%s209 + $0x78] sm:$0xff]
      %v246 = vld [vmem:[%s1] sm:$0x1f]
      %v247 = vld [vmem:[%s1 + $0x8] sm:$0x1f]
      %vm248 = vcmask 39936
      %v250 = vsel %vm248, %v230, 0
      %v253 = vsel %vm248, %v231, 0
      %v256 = vsel %vm248, %v232, 0
      %v259 = vsel %vm248, %v233, 0
      %v262 = vsel %vm248, %v234, 0
      %v265 = vsel %vm248, %v235, 0
      %v268 = vsel %vm248, %v236, 0
      %v271 = vsel %vm248, %v237, 0
      %v274 = vsel %vm248, %v238, 0
      %v277 = vsel %vm248, %v239, 0
      %v280 = vsel %vm248, %v240, 0
      %v283 = vsel %vm248, %v241, 0
      %v286 = vsel %vm248, %v242, 0
      %v289 = vsel %vm248, %v243, 0
      %v292 = vsel %vm248, %v244, 0
      %v295 = vsel %vm248, %v245, 0
      %vm297 = vcmask 1044480
      %v299 = vsel %vm297, %v246, 0
      %v302 = vsel %vm297, %v247, 0
      %304 = vmatpush.msra.mxu0 0.0
      %305 = vmatpush.msra.mxu0 0.0
      %306 = vmatpush.msra.mxu0 0.0
      %307 = vmatpush.msra.mxu0 0.0
      %308 = vmatpush.msra.mxu0 0.0
      %309 = vmatpush.msra.mxu0 0.0
      %310 = vmatpush.msra.mxu0 0.0
      %311 = vmatpush.msra.mxu0 0.0
      %312 = vmatpush.msra.mxu0 0.0
      %313 = vmatpush.msra.mxu0 0.0
      %314 = vmatpush.msra.mxu0 0.0
      %315 = vmatpush.msra.mxu0 0.0
      %316 = vmatpush.msra.mxu0 0.0
      %317 = vmatpush.msra.mxu0 0.0
      %318 = vmatpush.msra.mxu0 0.0
      %319 = vmatpush.msra.mxu0 %v299
      %320 = vmatmul.f32.gmra.mxu0 %v250
      %v321 = vpop.f32.mrf.mxu0
      %v322 = vadd.f32 0.0, %v321
      %323 = vmatmul.f32.gmra.mxu0 %v253
      %v324 = vpop.f32.mrf.mxu0
      %v325 = vadd.f32 0.0, %v324
      %326 = vmatmul.f32.gmra.mxu0 %v256
      %v327 = vpop.f32.mrf.mxu0
      %v328 = vadd.f32 0.0, %v327
      %329 = vmatmul.f32.gmra.mxu0 %v259
      %v330 = vpop.f32.mrf.mxu0
      %v331 = vadd.f32 0.0, %v330
      %332 = vmatmul.f32.gmra.mxu0 %v262
      %v333 = vpop.f32.mrf.mxu0
      %v334 = vadd.f32 0.0, %v333
      %335 = vmatmul.f32.gmra.mxu0 %v265
      %v336 = vpop.f32.mrf.mxu0
      %v337 = vadd.f32 0.0, %v336
      %338 = vmatmul.f32.gmra.mxu0 %v268
      %v339 = vpop.f32.mrf.mxu0
      %v340 = vadd.f32 0.0, %v339
      %341 = vmatmul.f32.gmra.mxu0 %v271
      %v342 = vpop.f32.mrf.mxu0
      %v343 = vadd.f32 0.0, %v342
      %344 = vmatmul.f32.gmra.mxu0 %v274
      %v345 = vpop.f32.mrf.mxu0
      %v346 = vadd.f32 0.0, %v345
      %347 = vmatmul.f32.gmra.mxu0 %v277
      %v348 = vpop.f32.mrf.mxu0
      %v349 = vadd.f32 0.0, %v348
      %350 = vmatmul.f32.gmra.mxu0 %v280
      %v351 = vpop.f32.mrf.mxu0
      %v352 = vadd.f32 0.0, %v351
      %353 = vmatmul.f32.gmra.mxu0 %v283
      %v354 = vpop.f32.mrf.mxu0
      %v355 = vadd.f32 0.0, %v354
      %356 = vmatmul.f32.gmra.mxu0 %v286
      %v357 = vpop.f32.mrf.mxu0
      %v358 = vadd.f32 0.0, %v357
      %359 = vmatmul.f32.gmra.mxu0 %v289
      %v360 = vpop.f32.mrf.mxu0
      %v361 = vadd.f32 0.0, %v360
      %362 = vmatmul.f32.gmra.mxu0 %v292
      %v363 = vpop.f32.mrf.mxu0
      %v364 = vadd.f32 0.0, %v363
      %365 = vmatmul.f32.gmra.mxu0 %v295
      %v366 = vpop.f32.mrf.mxu0
      %v367 = vadd.f32 0.0, %v366
      %368 = vdwg.mxu0
      %369 = vmatpush.msra.mxu0 0.0
      %370 = vmatpush.msra.mxu0 0.0
      %371 = vmatpush.msra.mxu0 0.0
      %372 = vmatpush.msra.mxu0 0.0
      %373 = vmatpush.msra.mxu0 0.0
      %374 = vmatpush.msra.mxu0 0.0
      %375 = vmatpush.msra.mxu0 0.0
      %376 = vmatpush.msra.mxu0 0.0
      %377 = vmatpush.msra.mxu0 0.0
      %378 = vmatpush.msra.mxu0 0.0
      %379 = vmatpush.msra.mxu0 0.0
      %380 = vmatpush.msra.mxu0 0.0
      %381 = vmatpush.msra.mxu0 0.0
      %382 = vmatpush.msra.mxu0 0.0
      %383 = vmatpush.msra.mxu0 0.0
      %384 = vmatpush.msra.mxu0 %v302
      %385 = vmatmul.f32.gmra.mxu0 %v250
      %v386 = vpop.f32.mrf.mxu0
      %v387 = vadd.f32 0.0, %v386
      %388 = vmatmul.f32.gmra.mxu0 %v253
      %v389 = vpop.f32.mrf.mxu0
      %v390 = vadd.f32 0.0, %v389
      %391 = vmatmul.f32.gmra.mxu0 %v256
      %v392 = vpop.f32.mrf.mxu0
      %v393 = vadd.f32 0.0, %v392
      %394 = vmatmul.f32.gmra.mxu0 %v259
      %v395 = vpop.f32.mrf.mxu0
      %v396 = vadd.f32 0.0, %v395
      %397 = vmatmul.f32.gmra.mxu0 %v262
      %v398 = vpop.f32.mrf.mxu0
      %v399 = vadd.f32 0.0, %v398
      %400 = vmatmul.f32.gmra.mxu0 %v265
      %v401 = vpop.f32.mrf.mxu0
      %v402 = vadd.f32 0.0, %v401
      %403 = vmatmul.f32.gmra.mxu0 %v268
      %v404 = vpop.f32.mrf.mxu0
      %v405 = vadd.f32 0.0, %v404
      %406 = vmatmul.f32.gmra.mxu0 %v271
      %v407 = vpop.f32.mrf.mxu0
      %v408 = vadd.f32 0.0, %v407
      %409 = vmatmul.f32.gmra.mxu0 %v274
      %v410 = vpop.f32.mrf.mxu0
      %v411 = vadd.f32 0.0, %v410
      %412 = vmatmul.f32.gmra.mxu0 %v277
      %v413 = vpop.f32.mrf.mxu0
      %v414 = vadd.f32 0.0, %v413
      %415 = vmatmul.f32.gmra.mxu0 %v280
      %v416 = vpop.f32.mrf.mxu0
      %v417 = vadd.f32 0.0, %v416
      %418 = vmatmul.f32.gmra.mxu0 %v283
      %v419 = vpop.f32.mrf.mxu0
      %v420 = vadd.f32 0.0, %v419
      %421 = vmatmul.f32.gmra.mxu0 %v286
      %v422 = vpop.f32.mrf.mxu0
      %v423 = vadd.f32 0.0, %v422
      %424 = vmatmul.f32.gmra.mxu0 %v289
      %v425 = vpop.f32.mrf.mxu0
      %v426 = vadd.f32 0.0, %v425
      %427 = vmatmul.f32.gmra.mxu0 %v292
      %v428 = vpop.f32.mrf.mxu0
      %v429 = vadd.f32 0.0, %v428
      %430 = vmatmul.f32.gmra.mxu0 %v295
      %v431 = vpop.f32.mrf.mxu0
      %v432 = vadd.f32 0.0, %v431
      %433 = vdwg.mxu0
      %v434 = vpack.c.bf16 %v387, %v322
      %v435 = vpack.c.bf16 %v390, %v325
      %v436 = vpack.c.bf16 %v393, %v328
      %v437 = vpack.c.bf16 %v396, %v331
      %v438 = vpack.c.bf16 %v399, %v334
      %v439 = vpack.c.bf16 %v402, %v337
      %v440 = vpack.c.bf16 %v405, %v340
      %v441 = vpack.c.bf16 %v408, %v343
      %v442 = vpack.c.bf16 %v411, %v346
      %v443 = vpack.c.bf16 %v414, %v349
      %v444 = vpack.c.bf16 %v417, %v352
      %v445 = vpack.c.bf16 %v420, %v355
      %v446 = vpack.c.bf16 %v423, %v358
      %v447 = vpack.c.bf16 %v426, %v361
      %v448 = vpack.c.bf16 %v429, %v364
      %v449 = vpack.c.bf16 %v432, %v367
      %vm450 = vcmask 1043456
      %vm451 = vcmask 31748
      %vm452 = vmor %vm451, %vm450
      %453 = vst.msk [vmem:[%s216] sm:$0xff] %vm452, %v434
      %454 = vst.msk [vmem:[%s216 + $0x8] sm:$0xff] %vm452, %v435
      %455 = vst.msk [vmem:[%s216 + $0x10] sm:$0xff] %vm452, %v436
      %456 = vst.msk [vmem:[%s216 + $0x18] sm:$0xff] %vm452, %v437
      %457 = vst.msk [vmem:[%s216 + $0x20] sm:$0xff] %vm452, %v438
      %458 = vst.msk [vmem:[%s216 + $0x28] sm:$0xff] %vm452, %v439
      %459 = vst.msk [vmem:[%s216 + $0x30] sm:$0xff] %vm452, %v440
      %460 = vst.msk [vmem:[%s216 + $0x38] sm:$0xff] %vm452, %v441
      %461 = vst.msk [vmem:[%s216 + $0x40] sm:$0xff] %vm452, %v442
      %462 = vst.msk [vmem:[%s216 + $0x48] sm:$0xff] %vm452, %v443
      %463 = vst.msk [vmem:[%s216 + $0x50] sm:$0xff] %vm452, %v444
      %464 = vst.msk [vmem:[%s216 + $0x58] sm:$0xff] %vm452, %v445
      %465 = vst.msk [vmem:[%s216 + $0x60] sm:$0xff] %vm452, %v446
      %466 = vst.msk [vmem:[%s216 + $0x68] sm:$0xff] %vm452, %v447
      %467 = vst.msk [vmem:[%s216 + $0x70] sm:$0xff] %vm452, %v448
      %468 = vst.msk [vmem:[%s216 + $0x78] sm:$0xff] %vm452, %v449
      %485 = vrot.lane.b32.xlu0 %v387, 124
      %v486 = vpop.permute.xlu0 %485
      %487 = vrot.lane.b32.xlu0 %v390, 124
      %v488 = vpop.permute.xlu0 %487
      %489 = vrot.lane.b32.xlu0 %v393, 124
      %v490 = vpop.permute.xlu0 %489
      %491 = vrot.lane.b32.xlu0 %v396, 124
      %v492 = vpop.permute.xlu0 %491
      %493 = vrot.lane.b32.xlu0 %v399, 124
      %v494 = vpop.permute.xlu0 %493
      %495 = vrot.lane.b32.xlu0 %v402, 124
      %v496 = vpop.permute.xlu0 %495
      %497 = vrot.lane.b32.xlu0 %v405, 124
      %v498 = vpop.permute.xlu0 %497
      %499 = vrot.lane.b32.xlu0 %v408, 124
      %v500 = vpop.permute.xlu0 %499
      %501 = vrot.lane.b32.xlu0 %v411, 124
      %v502 = vpop.permute.xlu0 %501
      %503 = vrot.lane.b32.xlu0 %v414, 124
      %v504 = vpop.permute.xlu0 %503
      %505 = vrot.lane.b32.xlu0 %v417, 124
      %v506 = vpop.permute.xlu0 %505
      %507 = vrot.lane.b32.xlu0 %v420, 124
      %v508 = vpop.permute.xlu0 %507
      %509 = vrot.lane.b32.xlu0 %v423, 124
      %v510 = vpop.permute.xlu0 %509
      %511 = vrot.lane.b32.xlu0 %v426, 124
      %v512 = vpop.permute.xlu0 %511
      %513 = vrot.lane.b32.xlu0 %v429, 124
      %v514 = vpop.permute.xlu0 %513
      %515 = vrot.lane.b32.xlu0 %v432, 124
      %v516 = vpop.permute.xlu0 %515
      %vm533 = vcmask 31744
      %534 = vst.msk [vmem:[%s222] sm:$0xff] %vm533, %v486
      %535 = vst.msk [vmem:[%s222 + $0x8] sm:$0xff] %vm533, %v488
      %536 = vst.msk [vmem:[%s222 + $0x10] sm:$0xff] %vm533, %v490
      %537 = vst.msk [vmem:[%s222 + $0x18] sm:$0xff] %vm533, %v492
      %538 = vst.msk [vmem:[%s222 + $0x20] sm:$0xff] %vm533, %v494
      %539 = vst.msk [vmem:[%s222 + $0x28] sm:$0xff] %vm533, %v496
      %540 = vst.msk [vmem:[%s222 + $0x30] sm:$0xff] %vm533, %v498
      %541 = vst.msk [vmem:[%s222 + $0x38] sm:$0xff] %vm533, %v500
      %542 = vst.msk [vmem:[%s222 + $0x40] sm:$0xff] %vm533, %v502
      %543 = vst.msk [vmem:[%s222 + $0x48] sm:$0xff] %vm533, %v504
      %544 = vst.msk [vmem:[%s222 + $0x50] sm:$0xff] %vm533, %v506
      %545 = vst.msk [vmem:[%s222 + $0x58] sm:$0xff] %vm533, %v508
      %546 = vst.msk [vmem:[%s222 + $0x60] sm:$0xff] %vm533, %v510
      %547 = vst.msk [vmem:[%s222 + $0x68] sm:$0xff] %vm533, %v512
      %548 = vst.msk [vmem:[%s222 + $0x70] sm:$0xff] %vm533, %v514
      %549 = vst.msk [vmem:[%s222 + $0x78] sm:$0xff] %vm533, %v516
      %550 = vrot.lane.b32.xlu0 %v387, 120
      %v551 = vpop.permute.xlu0 %550
      %552 = vrot.lane.b32.xlu0 %v390, 120
      %v553 = vpop.permute.xlu0 %552
      %554 = vrot.lane.b32.xlu0 %v393, 120
      %v555 = vpop.permute.xlu0 %554
      %556 = vrot.lane.b32.xlu0 %v396, 120
      %v557 = vpop.permute.xlu0 %556
      %558 = vrot.lane.b32.xlu0 %v399, 120
      %v559 = vpop.permute.xlu0 %558
      %560 = vrot.lane.b32.xlu0 %v402, 120
      %v561 = vpop.permute.xlu0 %560
      %562 = vrot.lane.b32.xlu0 %v405, 120
      %v563 = vpop.permute.xlu0 %562
      %564 = vrot.lane.b32.xlu0 %v408, 120
      %v565 = vpop.permute.xlu0 %564
      %566 = vrot.lane.b32.xlu0 %v411, 120
      %v567 = vpop.permute.xlu0 %566
      %568 = vrot.lane.b32.xlu0 %v414, 120
      %v569 = vpop.permute.xlu0 %568
      %570 = vrot.lane.b32.xlu0 %v417, 120
      %v571 = vpop.permute.xlu0 %570
      %572 = vrot.lane.b32.xlu0 %v420, 120
      %v573 = vpop.permute.xlu0 %572
      %574 = vrot.lane.b32.xlu0 %v423, 120
      %v575 = vpop.permute.xlu0 %574
      %576 = vrot.lane.b32.xlu0 %v426, 120
      %v577 = vpop.permute.xlu0 %576
      %578 = vrot.lane.b32.xlu0 %v429, 120
      %v579 = vpop.permute.xlu0 %578
      %580 = vrot.lane.b32.xlu0 %v432, 120
      %v581 = vpop.permute.xlu0 %580
      %598 = vst.msk [vmem:[%s228] sm:$0xff] %vm533, %v551
      %599 = vst.msk [vmem:[%s228 + $0x8] sm:$0xff] %vm533, %v553
      %600 = vst.msk [vmem:[%s228 + $0x10] sm:$0xff] %vm533, %v555
      %601 = vst.msk [vmem:[%s228 + $0x18] sm:$0xff] %vm533, %v557
      %602 = vst.msk [vmem:[%s228 + $0x20] sm:$0xff] %vm533, %v559
      %603 = vst.msk [vmem:[%s228 + $0x28] sm:$0xff] %vm533, %v561
      %604 = vst.msk [vmem:[%s228 + $0x30] sm:$0xff] %vm533, %v563
      %605 = vst.msk [vmem:[%s228 + $0x38] sm:$0xff] %vm533, %v565
      %606 = vst.msk [vmem:[%s228 + $0x40] sm:$0xff] %vm533, %v567
      %607 = vst.msk [vmem:[%s228 + $0x48] sm:$0xff] %vm533, %v569
      %608 = vst.msk [vmem:[%s228 + $0x50] sm:$0xff] %vm533, %v571
      %609 = vst.msk [vmem:[%s228 + $0x58] sm:$0xff] %vm533, %v573
      %610 = vst.msk [vmem:[%s228 + $0x60] sm:$0xff] %vm533, %v575
      %611 = vst.msk [vmem:[%s228 + $0x68] sm:$0xff] %vm533, %v577
      %612 = vst.msk [vmem:[%s228 + $0x70] sm:$0xff] %vm533, %v579
      %613 = vst.msk [vmem:[%s228 + $0x78] sm:$0xff] %vm533, %v581
      %s614 = smul.u32 16, %s16
      %p615 = scmp.lt.s32.totalorder %s614, 31
      %s616 = scalar_select %p615, %s614, 31
      %s617 = smul.addr %s616, 2
      %s618 = smul.addr %s617, 4
      %s619 = scalar_lea.vmem %s2, %s618
      %s620 = smul.u32 16, %s16
      %p621 = scmp.lt.s32.totalorder %s620, 31
      %s622 = scalar_select %p621, %s620, 31
      %s623 = smul.addr %s622, 8
      %s624 = scalar_lea.vmem %s3, %s623
      %s625 = smul.u32 16, %s16
      %p626 = scmp.lt.s32.totalorder %s625, 31
      %s627 = scalar_select %p626, %s625, 31
      %s628 = smul.addr %s627, 8
      %s629 = scalar_lea.vmem %s4, %s628
      // Predicated region
      $region29: #{tpu_custom_call.1} parent=27 // pred_check
        %p630 = pneg %p81
      $region30: #{tpu_custom_call.1} parent=27 // pred_check_branch
        %632 = sbr.rel (%p630) target = $region32
      $region31: #{tpu_custom_call.1} parent=27 // pred_region
        %s633 = smul.u32 16, %s16
      $region32: #{tpu_custom_call.1} parent=27 // pred_fallthru
        _
      // Predicated region
      $region33: #{tpu_custom_call.1} parent=27 // pred_check
        %p634 = pneg %p107
      $region34: #{tpu_custom_call.1} parent=27 // pred_check_branch
        %636 = sbr.rel (%p634) target = $region36
      $region35: #{tpu_custom_call.1} parent=27 // pred_region
        %s637 = smul.u32 16, %s16
      $region36: #{tpu_custom_call.1} parent=27 // pred_fallthru
        _
      // Predicated region
      $region37: #{tpu_custom_call.1} parent=27 // pred_check
        %p638 = pneg %p133
      $region38: #{tpu_custom_call.1} parent=27 // pred_check_branch
        %640 = sbr.rel (%p638) target = $region40
      $region39: #{tpu_custom_call.1} parent=27 // pred_region
        %s641 = smul.u32 16, %s16
      $region40: #{tpu_custom_call.1} parent=27 // pred_fallthru
        _
    $region28: #{tpu_custom_call.1} parent=5 // pred_fallthru
      _
    %p642 = scmp.le.s32.totalorder 2, %s11
    // Predicated region
    $region41: #{tpu_custom_call.1} parent=5 // pred_check
      %p643 = pneg %p642
    $region42: #{tpu_custom_call.1} parent=5 // pred_check_branch
      %645 = sbr.rel (%p643) target = $region44
    $region43: #{tpu_custom_call.1} parent=5 // pred_region
      %s646 = ssub.s32 %s11, 2
      // Predicated region
      $region45: #{tpu_custom_call.1} parent=43 // pred_check
        %p647 = pneg %p87
      $region46: #{tpu_custom_call.1} parent=43 // pred_check_branch
        %649 = sbr.rel (%p647) target = $region48
      $region47: #{tpu_custom_call.1} parent=43 // pred_region
        %s650 = smul.u32 16, %s17
        %p651 = scmp.lt.s32.totalorder %s650, 31
        %s652 = scalar_select %p651, %s650, 31
        %s653 = smul.addr %s652, 2
        %s654 = smul.addr %s653, 4
        %s655 = scalar_lea.vmem %s2, %s654
      $region48: #{tpu_custom_call.1} parent=43 // pred_fallthru
        _
      // Predicated region
      $region49: #{tpu_custom_call.1} parent=43 // pred_check
        %p656 = pneg %p113
      $region50: #{tpu_custom_call.1} parent=43 // pred_check_branch
        %658 = sbr.rel (%p656) target = $region52
      $region51: #{tpu_custom_call.1} parent=43 // pred_region
        %s659 = smul.u32 16, %s17
        %p660 = scmp.lt.s32.totalorder %s659, 31
        %s661 = scalar_select %p660, %s659, 31
        %s662 = smul.addr %s661, 8
        %s663 = scalar_lea.vmem %s3, %s662
      $region52: #{tpu_custom_call.1} parent=43 // pred_fallthru
        _
      // Predicated region
      $region53: #{tpu_custom_call.1} parent=43 // pred_check
        %p664 = pneg %p139
      $region54: #{tpu_custom_call.1} parent=43 // pred_check_branch
        %666 = sbr.rel (%p664) target = $region56
      $region55: #{tpu_custom_call.1} parent=43 // pred_region
        %s667 = smul.u32 16, %s17
        %p668 = scmp.lt.s32.totalorder %s667, 31
        %s669 = scalar_select %p668, %s667, 31
        %s670 = smul.addr %s669, 8
        %s671 = scalar_lea.vmem %s4, %s670
      $region56: #{tpu_custom_call.1} parent=43 // pred_fallthru
        _
    $region44: #{tpu_custom_call.1} parent=5 // pred_fallthru
      _
  $region6: #{tpu_custom_call.1} parent=0 // loop_footer
    %s15 = sadd.s32 1, %s11
  $region7: #{tpu_custom_call.1} parent=0 // loop_footer_branch
    %10 = sbr.rel target = $region3
  $region8: #{tpu_custom_call.1} parent=0 // loop_exit
    _

</llo_original>
